<compile_context>
chip_gen: v7x
topology: tpu7x:2x2x1
jax: 0.10.0
libtpu: 0.0.40
codegen_flags: <defaults>
</compile_context>

<pallas_src>
import functools

import jax
import jax.numpy as jnp
import numpy as np
from jax.experimental import pallas as pl
from jax.experimental.pallas import tpu as pltpu


def _adaptive_heatmap_loss_kernel(
    thr_ref,      # SMEM (1,)    float32 : adaptive threshold
    pred_ref,     # VMEM (TR, HWp)
    gt_ref,       # VMEM (TR, HWp)
    tw_ref,       # VMEM (TR, 1) : per-(b,k) target weight
    out_ref,      # VMEM (8, HWp): per-partition partial-sum accumulator
    *,
    keypoint_weight,
    background_weight,
    focal_alpha,
):
    t = pl.program_id(1)  # reduction axis (row tiles within this partition)

    @pl.when(t == 0)
    def _init():
        out_ref[...] = jnp.zeros_like(out_ref)

    thr = thr_ref[0]
    pred = pred_ref[...]
    gt = gt_ref[...]

    diff = pred - gt
    mse = diff * diff

    # Region weighting: single cmp + select (cheaper than mask arithmetic).
    loss = mse * jnp.where(
        gt > thr, jnp.float32(keypoint_weight), jnp.float32(background_weight)
    )

    if focal_alpha > 0:
        base = 1.0 - jnp.exp(-mse)          # exp runs on the EUP slot
        if float(focal_alpha) == 2.0:
            focal = base * base
        else:
            focal = jnp.power(base, jnp.float32(focal_alpha))
        loss = loss * focal

    # Target-weight broadcast per (b, k) row (lane splat of a (TR, 1) column).
    loss = loss * tw_ref[...]

    # Fold row groups of 8 with pure VPU adds (aligned static slices, no
    # reshape / no cross-lane XLU work), accumulate into the resident block.
    n_rows = loss.shape[0]
    partial = loss[0:8, :]
    for g in range(1, n_rows // 8):
        partial = partial + loss[g * 8:(g + 1) * 8, :]
    out_ref[...] += partial


def adaptive_heatmap_loss(
    pred_heatmaps,
    gt_heatmaps,
    target_weight=None,
    *,
    keypoint_weight=50.0,
    background_weight=1.0,
    adaptive_threshold=True,
    focal_alpha=2.0,
    quantile_sample_stride=1,
):
    B, K, H, W = pred_heatmaps.shape
    BK, HW = B * K, H * W

    pred2 = pred_heatmaps.reshape(BK, HW).astype(jnp.float32)
    gt2 = gt_heatmaps.reshape(BK, HW).astype(jnp.float32)
    if target_weight is None:
        tw = jnp.ones((BK, 1), jnp.float32)
    else:
        tw = target_weight.reshape(BK, 1).astype(jnp.float32)

    # ---- glue: adaptive threshold (torch.quantile -> jnp.quantile, both
    # linear interpolation; exact quantile requires a global sort).
    # quantile_sample_stride > 1 trades exactness for a much cheaper
    # subsampled estimate on very large inputs.
    # TODO(synk): replace with a single-pass Pallas histogram-CDF pass when an
    # approximate 0.9-quantile is acceptable.
    if adaptive_threshold:
        sample = gt2.ravel()
        if quantile_sample_stride > 1:
            sample = sample[::quantile_sample_stride]
        thr = jnp.clip(jnp.quantile(sample, 0.9), 0.05, 0.3).astype(jnp.float32)
    else:
        thr = jnp.float32(0.1)
    thr = jnp.reshape(thr, (1,))

    # ---- lane padding: keep every load/store lane-dense (multiple of 128).
    # Zero columns contribute exactly 0 loss; the mean denominator stays BK*HW.
    HW_pad = ((HW + 127) // 128) * 128
    if HW_pad != HW:
        pred2 = jnp.pad(pred2, ((0, 0), (0, HW_pad - HW)))
        gt2 = jnp.pad(gt2, ((0, 0), (0, HW_pad - HW)))

    # ---- row tiling: ~2 MiB per streamed input block, 2 megacore partitions.
    P = 2  # parallel partitions (both TCs on v7x; harmless serial loop on 1-TC chips)
    tr_target = max(8, min(512, ((2 << 20) // (HW_pad * 4)) // 8 * 8))
    rows8 = ((BK + 7) // 8) * 8
    tiles_per_part = max(1, -(-rows8 // (P * tr_target)))
    tr = -(-rows8 // (P * tiles_per_part))
    tr = ((tr + 7) // 8) * 8
    padded_bk = P * tiles_per_part * tr

    if padded_bk != BK:
        pad = padded_bk - BK
        # Zero rows contribute exactly 0 (mse == 0 -> loss == 0); the mean
        # denominator below stays the original BK * HW.
        pred2 = jnp.pad(pred2, ((0, pad), (0, 0)))
        gt2 = jnp.pad(gt2, ((0, pad), (0, 0)))
        tw = jnp.pad(tw, ((0, pad), (0, 0)))

    block_bytes = tr * HW_pad * 4
    # Double-buffered pred/gt streams + block-sized elementwise temporaries;
    # explicit limit keeps the larger tiles viable on v5e/v6e scoped defaults
    # and stays under v7x's 64 MiB physical VMEM.
    vmem_limit = int(min(56 * 2**20, max(40 * 2**20, 20 * block_bytes)))

    kernel = functools.partial(
        _adaptive_heatmap_loss_kernel,
        keypoint_weight=float(keypoint_weight),
        background_weight=float(background_weight),
        focal_alpha=float(focal_alpha),
    )

    row_block = lambda p, t: (p * tiles_per_part + t, 0)

    grid_spec = pltpu.PrefetchScalarGridSpec(
        num_scalar_prefetch=0,
        grid=(P, tiles_per_part),
        in_specs=[
            pl.BlockSpec(memory_space=pltpu.MemorySpace.SMEM),   # threshold
            pl.BlockSpec((tr, HW_pad), row_block),               # pred
            pl.BlockSpec((tr, HW_pad), row_block),               # gt
            pl.BlockSpec((tr, 1), row_block),                    # target weight
        ],
        out_specs=pl.BlockSpec((8, HW_pad), lambda p, t: (p, 0)),  # per-part partials
    )

    partial_sums = pl.pallas_call(
        kernel,
        out_shape=jax.ShapeDtypeStruct((P * 8, HW_pad), jnp.float32),
        grid_spec=grid_spec,
        compiler_params=pltpu.CompilerParams(
            dimension_semantics=("parallel", "arbitrary"),
            vmem_limit_bytes=vmem_limit,
        ),
    )(thr, pred2, gt2, tw)

    # Single final reduction + one scale by 1/N (better numerics than per-tile
    # scaled scalar accumulation).
    return jnp.sum(partial_sums) / jnp.float32(BK * HW)


def _reference_loss(pred, gt, tw, keypoint_weight=50.0, background_weight=1.0,
                    focal_alpha=2.0):
    """Pure-JAX reference mirroring the PyTorch forward."""
    thr = jnp.clip(jnp.quantile(gt.astype(jnp.float32).ravel(), 0.9), 0.05, 0.3)
    kmask = (gt > thr).astype(jnp.float32)
    bmask = (gt <= thr).astype(jnp.float32)
    mse = (pred - gt) ** 2
    wl = mse * kmask * keypoint_weight + mse * bmask * background_weight
    pt = jnp.exp(-mse)
    wl = wl * (1.0 - pt) ** focal_alpha
    if tw is not None:
        wl = wl * tw[:, :, None, None]
    return jnp.mean(wl)


if __name__ == "__main__":
    key = jax.random.PRNGKey(0)
    k1, k2, k3 = jax.random.split(key, 3)

    B, K, H, W = 2, 8, 16, 16
    gt = jax.random.uniform(k1, (B, K, H, W), dtype=jnp.float32)          # heatmaps in [0,1)
    pred = gt + 0.1 * jax.random.normal(k2, (B, K, H, W), dtype=jnp.float32)
    target_weight = jax.random.uniform(k3, (B, K), dtype=jnp.float32)

    loss = adaptive_heatmap_loss(pred, gt, target_weight)
    loss = jax.block_until_ready(loss)

    ref = jax.block_until_ready(_reference_loss(pred, gt, target_weight))
    assert np.allclose(np.asarray(loss), np.asarray(ref), rtol=1e-5, atol=1e-6), (
        loss, ref)

    print("KERNEL_OK")
</pallas_src>

<mosaic_0001>
module attributes {stable_mosaic.version = 11 : i64} {
  func.func @_adaptive_heatmap_loss_kernel(%arg0: i32, %arg1: i32, %arg2: memref<1xf32, #tpu.memory_space<smem>>, %arg3: memref<8x256xf32, #tpu.memory_space<vmem>>, %arg4: memref<8x256xf32, #tpu.memory_space<vmem>>, %arg5: memref<8x1xf32, #tpu.memory_space<vmem>>, %arg6: memref<8x256xf32, #tpu.memory_space<vmem>>) attributes {dimension_semantics = [#tpu.dimension_semantics<parallel>, #tpu.dimension_semantics<arbitrary>], iteration_bounds = array<i64: 2, 1>, scalar_prefetch = 0 : i64, scratch_operands = 0 : i64, tpu.core_type = #tpu.core_type<tc>, window_params = [{transform_indices = @transform_0, window_bounds = array<i64: 1>}, {transform_indices = @transform_1, window_bounds = array<i64: 8, 256>}, {transform_indices = @transform_2, window_bounds = array<i64: 8, 256>}, {transform_indices = @transform_3, window_bounds = array<i64: 8, 1>}, {transform_indices = @transform_4, window_bounds = array<i64: 8, 256>}]} {
    %c0_i32 = arith.constant 0 : i32
    %0 = arith.cmpi eq, %arg1, %c0_i32 : i32
    %1 = arith.extui %0 : i1 to i32
    %c0_i32_0 = arith.constant 0 : i32
    %2 = arith.cmpi ne, %1, %c0_i32_0 : i32
    scf.if %2 {
      %cst_14 = arith.constant 0.000000e+00 : f32
      %27 = vector.broadcast %cst_14 : f32 to vector<8x256xf32>
      %c0_15 = arith.constant 0 : index
      %c0_16 = arith.constant 0 : index
      %28 = vector.load %arg6[%c0_15, %c0_16] : memref<8x256xf32, #tpu.memory_space<vmem>>, vector<8x256xf32>
      tpu.vector_store %arg6[%c0_15, %c0_16], %27 {strides = array<i32>} : memref<8x256xf32, #tpu.memory_space<vmem>>, vector<8x256xf32>,
    } else {
    }
    %c0 = arith.constant 0 : index
    %3 = memref.load %arg2[%c0] : memref<1xf32, #tpu.memory_space<smem>>
    %c0_1 = arith.constant 0 : index
    %c0_2 = arith.constant 0 : index
    %4 = vector.load %arg3[%c0_1, %c0_2] : memref<8x256xf32, #tpu.memory_space<vmem>>, vector<8x256xf32>
    %c0_3 = arith.constant 0 : index
    %c0_4 = arith.constant 0 : index
    %5 = vector.load %arg4[%c0_3, %c0_4] : memref<8x256xf32, #tpu.memory_space<vmem>>, vector<8x256xf32>
    %6 = arith.subf %4, %5 : vector<8x256xf32>
    %7 = arith.mulf %6, %6 : vector<8x256xf32>
    %8 = vector.broadcast %3 : f32 to vector<8x256xf32>
    %9 = arith.cmpf ogt, %5, %8 : vector<8x256xf32>
    %cst = arith.constant 5.000000e+01 : f32
    %cst_5 = arith.constant 1.000000e+00 : f32
    %10 = vector.broadcast %cst : f32 to vector<8x256xf32>
    %11 = vector.broadcast %cst_5 : f32 to vector<8x256xf32>
    %12 = arith.select %9, %10, %11 : vector<8x256xi1>, vector<8x256xf32>
    %13 = arith.mulf %7, %12 : vector<8x256xf32>
    %cst_6 = arith.constant 0.000000e+00 : f32
    %14 = vector.broadcast %cst_6 : f32 to vector<8x256xf32>
    %15 = arith.subf %14, %7 : vector<8x256xf32>
    %16 = math.exp %15 : vector<8x256xf32>
    %cst_7 = arith.constant 1.000000e+00 : f32
    %17 = vector.broadcast %cst_7 : f32 to vector<8x256xf32>
    %18 = arith.subf %17, %16 : vector<8x256xf32>
    %19 = arith.mulf %18, %18 : vector<8x256xf32>
    %20 = arith.mulf %13, %19 : vector<8x256xf32>
    %c0_8 = arith.constant 0 : index
    %c0_9 = arith.constant 0 : index
    %21 = vector.load %arg5[%c0_8, %c0_9] : memref<8x1xf32, #tpu.memory_space<vmem>>, vector<8x1xf32>
    %22 = vector.broadcast %21 : vector<8x1xf32> to vector<8x256xf32>
    %23 = arith.mulf %20, %22 : vector<8x256xf32>
    %c0_10 = arith.constant 0 : index
    %c0_11 = arith.constant 0 : index
    %24 = vector.load %arg6[%c0_10, %c0_11] : memref<8x256xf32, #tpu.memory_space<vmem>>, vector<8x256xf32>
    %25 = arith.addf %24, %23 : vector<8x256xf32>
    %c0_12 = arith.constant 0 : index
    %c0_13 = arith.constant 0 : index
    %26 = vector.load %arg6[%c0_12, %c0_13] : memref<8x256xf32, #tpu.memory_space<vmem>>, vector<8x256xf32>
    tpu.vector_store %arg6[%c0_12, %c0_13], %25 {strides = array<i32>} : memref<8x256xf32, #tpu.memory_space<vmem>>, vector<8x256xf32>,
    return
  }
  func.func @transform_0(%arg0: i32, %arg1: i32) -> i32 {
    %c0_i32 = arith.constant 0 : i32
    %c0_i32_0 = arith.constant 0 : i32
    return %c0_i32 : i32
  }
  func.func @transform_1(%arg0: i32, %arg1: i32) -> (i32, i32) {
    %c1_i32 = arith.constant 1 : i32
    %0 = arith.muli %arg0, %c1_i32 : i32
    %1 = arith.addi %0, %arg1 : i32
    %c0_i32 = arith.constant 0 : i32
    %c0_i32_0 = arith.constant 0 : i32
    return %1, %c0_i32 : i32, i32
  }
  func.func @transform_2(%arg0: i32, %arg1: i32) -> (i32, i32) {
    %c1_i32 = arith.constant 1 : i32
    %0 = arith.muli %arg0, %c1_i32 : i32
    %1 = arith.addi %0, %arg1 : i32
    %c0_i32 = arith.constant 0 : i32
    %c0_i32_0 = arith.constant 0 : i32
    return %1, %c0_i32 : i32, i32
  }
  func.func @transform_3(%arg0: i32, %arg1: i32) -> (i32, i32) {
    %c1_i32 = arith.constant 1 : i32
    %0 = arith.muli %arg0, %c1_i32 : i32
    %1 = arith.addi %0, %arg1 : i32
    %c0_i32 = arith.constant 0 : i32
    %c0_i32_0 = arith.constant 0 : i32
    return %1, %c0_i32 : i32, i32
  }
  func.func @transform_4(%arg0: i32, %arg1: i32) -> (i32, i32) {
    %c0_i32 = arith.constant 0 : i32
    %c0_i32_0 = arith.constant 0 : i32
    return %arg0, %c0_i32 : i32, i32
  }
}

</mosaic_0001>

<llo_original>
// kernel: tpu_custom_call.1
$region0: #{tpu_custom_call.1}
  #allocation0 [shape = 'u32[]', space=smem, size = 0x4, offset = 0x4, fixed_abs, tag = 'smem constant byte address 0x4 - core index']
  #allocation1 [shape = 'u32[144,128]{1,0:T(1,128)}', space=vmem, size = 0x12000, scoped, tag = 'internal scratch']
  #allocation2 [shape = 'f32[1]{0:T(128)S(6)}', space=smem, size = 0x200, scoped, tag = 'scoped memory for tpu_custom_call.1']
  %s0 = inlined_call_operand.<no memory space> [shape: f32[1], index: 0, kind: input, shape index: {}]
  %s1 = inlined_call_operand.hbm [shape: f32[16,256], index: 1, kind: input, shape index: {}]
  %s2 = inlined_call_operand.hbm [shape: f32[16,256], index: 2, kind: input, shape index: {}]
  %s3 = inlined_call_operand.vmem [shape: f32[16,1], index: 3, kind: input, shape index: {}]
  %s4 = inlined_call_operand.hbm [shape: f32[16,256], index: 4, kind: output, shape index: {}]
  %s5 = sld [smem:[#allocation0]]
  $region61: #{tpu_custom_call.1} parent=0
    _
  %s7 = ssub.s32 1, %s5
  %s8 = scalar_select 0, %s7, %s5
  %9 = sst [smem:[#allocation2]] %s0
  $region1: #{tpu_custom_call.1} parent=0
    #allocation3 [shape = 'u8[16384]{0}', space=vmem, size = 0x4000, scoped, tag = 'input window, operand 1']
    #allocation4 [shape = 's32[2]{0}', space=sflag, size = 0x8, scoped, tag = 'scoped memory for tpu_custom_call.1']
    #allocation5 [shape = 's32[2]{0}', space=sflag, size = 0x8, scoped, tag = 'scoped memory for tpu_custom_call.1']
    #allocation6 [shape = 'u8[16384]{0}', space=vmem, size = 0x4000, scoped, tag = 'input window, operand 2']
    #allocation7 [shape = 's32[2]{0}', space=sflag, size = 0x8, scoped, tag = 'scoped memory for tpu_custom_call.1']
    #allocation8 [shape = 'u8[16384]{0}', space=vmem, size = 0x4000, scoped, tag = 'output window, operand 0']
    %10 = vsyncpa [#allocation4], 0
    %s11 = scalar_lea.sflag [#allocation4], 1
    %12 = vsyncpa %s11, 0
    %13 = vsyncpa [#allocation7], 0
    %s14 = scalar_lea.sflag [#allocation7], 1
    %15 = vsyncpa %s14, 0
    %16 = vsyncpa [#allocation5], 0
    %s17 = scalar_lea.sflag [#allocation5], 1
    %18 = vsyncpa %s17, 0
    loop: start=0, step=1, limit=4
    $region2: #{tpu_custom_call.1} parent=1 // loop_pre_header
      _
    $region3: #{tpu_custom_call.1} parent=1 // loop_header
      %s20 = sphi 0, %s24
      %p21 = scmp.ge.s32.totalorder %s20, 4
      %s27 = sphi 0, %s39
      %s28 = sphi 0, %s35
      %s29 = sphi 0, %s27
      %s30 = sphi 0, %s28
      %s31 = sphi 0, %s29
      %s32 = sphi 0, %s30
      %s40 = sphi 0, %s40
      %s42 = sphi 0, %s40
      %s43 = sphi 0, %s42
      %s57 = sphi 0, %s43
      %s65 = sphi 0, %s67
      %s68 = sphi 0, %s65
      %s69 = sphi 0, %s68
      %s85 = sphi 0, %s69
      %s93 = sphi 0, %s95
      %s96 = sphi 0, %s93
      %s97 = sphi 0, %s96
      %s113 = sphi 0, %s97
      %s121 = sphi 0, %s123
      %s124 = sphi 0, %s121
      %s125 = sphi 0, %s124
      %s141 = sphi 0, %s125
      %s147 = sphi 0, %s149
      %s150 = sphi 0, %s147
      %s151 = sphi 0, %s150
      %s167 = sphi 0, %s151
    $region4: #{tpu_custom_call.1} parent=1 // loop_header_branch
      %23 = sbr.rel (%p21) target = $region8
    $region5: #{tpu_custom_call.1} parent=1 // loop_body
      %s25 = ssub.s32 %s20, 1
      %s26 = ssub.s32 %s20, 2
      %s33 = sadd.s32 1, %s28
      %p34 = scmp.ge.s32.totalorder %s33, 1
      %s35 = scalar_select %p34, 0, %s33
      %s36 = sadd.s32 1, %s27
      %s37 = scalar_select %p34, %s36, %s27
      %p38 = scmp.ge.s32.totalorder %s37, 2
      %s39 = scalar_select %p38, 0, %s37
      %s41 = sadd.s32 %s40, 1
      %p44 = scmp.eq.s32.totalorder %s20, 1
      %p45 = scmp.ne.s32.totalorder %s40, %s42
      %p46 = scmp.eq.s32.totalorder %s20, 0
      %p47 = por %p45, %p46
      %p48 = scmp.ne.s32.totalorder %s40, %s42
      %p49 = scmp.eq.s32.totalorder %s25, 1
      %p50 = por %p48, %p49
      %p51 = scmp.ne.s32.totalorder %s42, %s43
      %p52 = scmp.eq.s32.totalorder %s25, 0
      %p53 = por %p51, %p52
      %p54 = scmp.ne.s32.totalorder %s42, %s43
      %p55 = scmp.eq.s32.totalorder %s26, 1
      %p56 = por %p54, %p55
      %p58 = scmp.ne.s32.totalorder %s43, %s57
      %p59 = scmp.eq.s32.totalorder %s26, 0
      %p60 = por %p58, %p59
      %s61 = sadd.s32 %s27, %s28
      %s62 = sadd.s32 %s39, %s35
      %s63 = ssub.s32 %s61, %s62
      %p64 = scmp.eq.s32.totalorder %s63, 0
      %s66 = sadd.s32 %s65, 1
      %s67 = scalar_select %p64, %s65, %s66
      %p70 = pneg %p64
      %p71 = scmp.eq.s32.totalorder %s20, 1
      %p72 = por %p70, %p71
      %p73 = scmp.ne.s32.totalorder %s65, %s68
      %p74 = scmp.eq.s32.totalorder %s20, 0
      %p75 = por %p73, %p74
      %p76 = scmp.ne.s32.totalorder %s65, %s68
      %p77 = scmp.eq.s32.totalorder %s25, 1
      %p78 = por %p76, %p77
      %p79 = scmp.ne.s32.totalorder %s68, %s69
      %p80 = scmp.eq.s32.totalorder %s25, 0
      %p81 = por %p79, %p80
      %p82 = scmp.ne.s32.totalorder %s68, %s69
      %p83 = scmp.eq.s32.totalorder %s26, 1
      %p84 = por %p82, %p83
      %p86 = scmp.ne.s32.totalorder %s69, %s85
      %p87 = scmp.eq.s32.totalorder %s26, 0
      %p88 = por %p86, %p87
      %s89 = sadd.s32 %s27, %s28
      %s90 = sadd.s32 %s39, %s35
      %s91 = ssub.s32 %s89, %s90
      %p92 = scmp.eq.s32.totalorder %s91, 0
      %s94 = sadd.s32 %s93, 1
      %s95 = scalar_select %p92, %s93, %s94
      %p98 = pneg %p92
      %p99 = scmp.eq.s32.totalorder %s20, 1
      %p100 = por %p98, %p99
      %p101 = scmp.ne.s32.totalorder %s93, %s96
      %p102 = scmp.eq.s32.totalorder %s20, 0
      %p103 = por %p101, %p102
      %p104 = scmp.ne.s32.totalorder %s93, %s96
      %p105 = scmp.eq.s32.totalorder %s25, 1
      %p106 = por %p104, %p105
      %p107 = scmp.ne.s32.totalorder %s96, %s97
      %p108 = scmp.eq.s32.totalorder %s25, 0
      %p109 = por %p107, %p108
      %p110 = scmp.ne.s32.totalorder %s96, %s97
      %p111 = scmp.eq.s32.totalorder %s26, 1
      %p112 = por %p110, %p111
      %p114 = scmp.ne.s32.totalorder %s97, %s113
      %p115 = scmp.eq.s32.totalorder %s26, 0
      %p116 = por %p114, %p115
      %s117 = sadd.s32 %s27, %s28
      %s118 = sadd.s32 %s39, %s35
      %s119 = ssub.s32 %s117, %s118
      %p120 = scmp.eq.s32.totalorder %s119, 0
      %s122 = sadd.s32 %s121, 1
      %s123 = scalar_select %p120, %s121, %s122
      %p126 = pneg %p120
      %p127 = scmp.eq.s32.totalorder %s20, 1
      %p128 = por %p126, %p127
      %p129 = scmp.ne.s32.totalorder %s121, %s124
      %p130 = scmp.eq.s32.totalorder %s20, 0
      %p131 = por %p129, %p130
      %p132 = scmp.ne.s32.totalorder %s121, %s124
      %p133 = scmp.eq.s32.totalorder %s25, 1
      %p134 = por %p132, %p133
      %p135 = scmp.ne.s32.totalorder %s124, %s125
      %p136 = scmp.eq.s32.totalorder %s25, 0
      %p137 = por %p135, %p136
      %p138 = scmp.ne.s32.totalorder %s124, %s125
      %p139 = scmp.eq.s32.totalorder %s26, 1
      %p140 = por %p138, %p139
      %p142 = scmp.ne.s32.totalorder %s125, %s141
      %p143 = scmp.eq.s32.totalorder %s26, 0
      %p144 = por %p142, %p143
      %s145 = ssub.s32 %s27, %s39
      %p146 = scmp.eq.s32.totalorder %s145, 0
      %s148 = sadd.s32 %s147, 1
      %s149 = scalar_select %p146, %s147, %s148
      %p152 = pneg %p146
      %p153 = scmp.eq.s32.totalorder %s20, 1
      %p154 = por %p152, %p153
      %p155 = scmp.ne.s32.totalorder %s147, %s150
      %p156 = scmp.eq.s32.totalorder %s20, 0
      %p157 = por %p155, %p156
      %p158 = scmp.ne.s32.totalorder %s147, %s150
      %p159 = scmp.eq.s32.totalorder %s25, 1
      %p160 = por %p158, %p159
      %p161 = scmp.ne.s32.totalorder %s150, %s151
      %p162 = scmp.eq.s32.totalorder %s25, 0
      %p163 = por %p161, %p162
      %p164 = scmp.ne.s32.totalorder %s150, %s151
      %p165 = scmp.eq.s32.totalorder %s26, 1
      %p166 = por %p164, %p165
      %p168 = scmp.ne.s32.totalorder %s151, %s167
      %p169 = scmp.eq.s32.totalorder %s26, 0
      %p170 = por %p168, %p169
      %p171 = scmp.le.s32.totalorder 1, %s20
      %p172 = scmp.lt.s32.totalorder %s20, 3
      %p173 = pnand %p171, %p172
      %p174 = pneg %p173
      // Predicated region
      $region9: #{tpu_custom_call.1} parent=5 // pred_check
        _
      $region10: #{tpu_custom_call.1} parent=5 // pred_check_branch
        %176 = sbr.rel (%p173) target = $region12
      $region11: #{tpu_custom_call.1} parent=5 // pred_region
        %s177 = ssub.s32 %s20, 1
        // Predicated region
        $region13: #{tpu_custom_call.1} parent=11 // pred_check
          %p178 = pneg %p53
        $region14: #{tpu_custom_call.1} parent=11 // pred_check_branch
          %180 = sbr.rel (%p178) target = $region16
        $region15: #{tpu_custom_call.1} parent=11 // pred_region
          _
        $region16: #{tpu_custom_call.1} parent=11 // pred_fallthru
          _
      $region12: #{tpu_custom_call.1} parent=5 // pred_fallthru
        _
      %p181 = scmp.lt.s32.totalorder %s20, 2
      // Predicated region
      $region17: #{tpu_custom_call.1} parent=5 // pred_check
        %p182 = pneg %p181
      $region18: #{tpu_custom_call.1} parent=5 // pred_check_branch
        %184 = sbr.rel (%p182) target = $region20
      $region19: #{tpu_custom_call.1} parent=5 // pred_region
        // Predicated region
        $region21: #{tpu_custom_call.1} parent=19 // pred_check
          %p185 = pneg %p75
        $region22: #{tpu_custom_call.1} parent=19 // pred_check_branch
          %187 = sbr.rel (%p185) target = $region24
        $region23: #{tpu_custom_call.1} parent=19 // pred_region
          %s188 = sand.u32 %s65, 1
          %s189 = scalar_lea.sflag [#allocation4], %s188
          %s190 = sand.u32 %s65, 1
          %s191 = smul.addr %s190, 16
          %s192 = scalar_lea.vmem [#allocation3], %s191
          %s193 = sadd.s32 %s27, %s28
          %s195 = ssub.s32 256, 256
          %196 = vsyncadd %s189, %s195
          %s197 = smul.addr %s193, 2
          %s198 = smul.addr %s197, 128
          %s199 = scalar_lea.hbm %s1, %s198
          %s201 = sshll.u32 %s192, 4
          %s202 = int_to_ptr.vmem [resolvable:$true] %s201
          %204 = dma.hbm_to_vmem [thread:$0]  %s199, 256, %s202, %s189
        $region24: #{tpu_custom_call.1} parent=19 // pred_fallthru
          _
        // Predicated region
        $region25: #{tpu_custom_call.1} parent=19 // pred_check
          %p205 = pneg %p103
        $region26: #{tpu_custom_call.1} parent=19 // pred_check_branch
          %207 = sbr.rel (%p205) target = $region28
        $region27: #{tpu_custom_call.1} parent=19 // pred_region
          %s208 = sand.u32 %s93, 1
          %s209 = scalar_lea.sflag [#allocation7], %s208
          %s210 = sand.u32 %s93, 1
          %s211 = smul.addr %s210, 16
          %s212 = scalar_lea.vmem [#allocation6], %s211
          %s213 = sadd.s32 %s27, %s28
          %s215 = ssub.s32 256, 256
          %216 = vsyncadd %s209, %s215
          %s217 = smul.addr %s213, 2
          %s218 = smul.addr %s217, 128
          %s219 = scalar_lea.hbm %s2, %s218
          %s221 = sshll.u32 %s212, 4
          %s222 = int_to_ptr.vmem [resolvable:$true] %s221
          %224 = dma.hbm_to_vmem [thread:$0]  %s219, 256, %s222, %s209
        $region28: #{tpu_custom_call.1} parent=19 // pred_fallthru
          _
        // Predicated region
        $region29: #{tpu_custom_call.1} parent=19 // pred_check
          %p225 = pneg %p131
        $region30: #{tpu_custom_call.1} parent=19 // pred_check_branch
          %227 = sbr.rel (%p225) target = $region32
        $region31: #{tpu_custom_call.1} parent=19 // pred_region
          %s228 = sadd.s32 %s27, %s28
          %p229 = scmp.lt.s32.totalorder %s228, 1
          %s230 = scalar_select %p229, %s228, 1
          %s231 = smul.addr %s230, 8
          %s232 = scalar_lea.vmem %s3, %s231
          %s233 = sadd.s32 %s27, %s28
        $region32: #{tpu_custom_call.1} parent=19 // pred_fallthru
          _
      $region20: #{tpu_custom_call.1} parent=5 // pred_fallthru
        _
      %p234 = scmp.le.s32.totalorder 1, %s20
      %p235 = scmp.lt.s32.totalorder %s20, 3
      %p236 = pnand %p234, %p235
      %p237 = pneg %p236
      // Predicated region
      $region33: #{tpu_custom_call.1} parent=5 // pred_check
        _
      $region34: #{tpu_custom_call.1} parent=5 // pred_check_branch
        %239 = sbr.rel (%p236) target = $region36
      $region35: #{tpu_custom_call.1} parent=5 // pred_region
        %s240 = ssub.s32 %s20, 1
        %s241 = sand.u32 %s68, 1
        %s242 = scalar_lea.sflag [#allocation4], %s241
        %s243 = sand.u32 %s68, 1
        %s244 = smul.addr %s243, 16
        %s245 = scalar_lea.vmem [#allocation3], %s244
        // Predicated region
        $region37: #{tpu_custom_call.1} parent=35 // pred_check
          %p246 = pneg %p81
        $region38: #{tpu_custom_call.1} parent=35 // pred_check_branch
          %248 = sbr.rel (%p246) target = $region40
        $region39: #{tpu_custom_call.1} parent=35 // pred_region
          %249 = dma.done %s242, 256
        $region40: #{tpu_custom_call.1} parent=35 // pred_fallthru
          _
        %s250 = sand.u32 %s96, 1
        %s251 = scalar_lea.sflag [#allocation7], %s250
        %s252 = sand.u32 %s96, 1
        %s253 = smul.addr %s252, 16
        %s254 = scalar_lea.vmem [#allocation6], %s253
        // Predicated region
        $region41: #{tpu_custom_call.1} parent=35 // pred_check
          %p255 = pneg %p109
        $region42: #{tpu_custom_call.1} parent=35 // pred_check_branch
          %257 = sbr.rel (%p255) target = $region44
        $region43: #{tpu_custom_call.1} parent=35 // pred_region
          %258 = dma.done %s251, 256
        $region44: #{tpu_custom_call.1} parent=35 // pred_fallthru
          _
        %p259 = pneg %p53
        %p260 = pneg %p50
        %s261 = sand.u32 %s68, 1
        %s262 = scalar_lea.sflag [#allocation4], %s261
        %s263 = sand.u32 %s68, 1
        %s264 = smul.addr %s263, 16
        %s265 = scalar_lea.vmem [#allocation3], %s264
        %p266 = pneg %p81
        %p267 = pneg %p78
        %s268 = sand.u32 %s96, 1
        %s269 = scalar_lea.sflag [#allocation7], %s268
        %s270 = sand.u32 %s96, 1
        %s271 = smul.addr %s270, 16
        %s272 = scalar_lea.vmem [#allocation6], %s271
        %p273 = pneg %p109
        %p274 = pneg %p106
        %s275 = sadd.s32 %s29, %s30
        %p276 = scmp.lt.s32.totalorder %s275, 1
        %s277 = scalar_select %p276, %s275, 1
        %s278 = smul.addr %s277, 8
        %s279 = scalar_lea.vmem %s3, %s278
        %p280 = pneg %p137
        %p281 = pneg %p134
        %p282 = pneg %p163
        %p283 = pneg %p160
        %s284 = sand.u32 %s150, 1
        %s285 = scalar_lea.sflag [#allocation5], %s284
        %s286 = sand.u32 %s150, 1
        %s287 = smul.addr %s286, 16
        %s288 = scalar_lea.vmem [#allocation8], %s287
        %s289 = sadd.s32 %s29, %s30
        %s290 = sadd.s32 %s29, %s30
        %s291 = sadd.s32 %s29, %s30
        %p292 = scmp.lt.s32.totalorder %s291, 1
        %s293 = scalar_select %p292, %s291, 1
        %s294 = smul.addr %s293, 8
        %s295 = scalar_lea.vmem %s3, %s294
        %s296 = sadd.s32 %s29, %s30
        %p297 = scmp.eq.s32.totalorder %s30, 0
        // Predicated region
        $region45: #{tpu_custom_call.1} parent=35 // pred_check
          %p298 = pneg %p297
        $region46: #{tpu_custom_call.1} parent=35 // pred_check_branch
          %300 = sbr.rel (%p298) target = $region48
        $region47: #{tpu_custom_call.1} parent=35 // pred_region
          %301 = vst [vmem:[%s288] sm:$0xff] 0.0
          %302 = vst [vmem:[%s288 + $0x8] sm:$0xff] 0.0
        $region48: #{tpu_custom_call.1} parent=35 // pred_fallthru
          _
        %s303 = sld [smem:[#allocation2]]
        %v304 = vld [vmem:[%s245] sm:$0xff]
        %v305 = vld [vmem:[%s245 + $0x8] sm:$0xff]
        %v306 = vld [vmem:[%s254] sm:$0xff]
        %v307 = vld [vmem:[%s254 + $0x8] sm:$0xff]
        %v308 = vsub.f32 %v304, %v306
        %v309 = vsub.f32 %v305, %v307
        %v310 = vmul.f32 %v308, %v308
        %v311 = vmul.f32 %v309, %v309
        %v312 = vstv %s303
        %vm313 = vcmp.gt.f32.partialorder %v306, %v312
        %vm314 = vcmp.gt.f32.partialorder %v307, %v312
        %v315 = vsel %vm313, 50.0, 1.0
        %v316 = vsel %vm314, 50.0, 1.0
        %v317 = vmul.f32 %v310, %v315
        %v318 = vmul.f32 %v311, %v316
        %v319 = vsub.f32 0.0, %v310
        %v320 = vsub.f32 0.0, %v311
        %v321 = vmul.f32 %v319, 1.442695
        %v322 = vpow.pop %v321
        %v323 = vmul.f32 %v320, 1.442695
        %v324 = vpow.pop %v323
        %v325 = vsub.f32 1.0, %v322
        %v326 = vsub.f32 1.0, %v324
        %v327 = vmul.f32 %v325, %v325
        %v328 = vmul.f32 %v326, %v326
        %v329 = vmul.f32 %v317, %v327
        %v330 = vmul.f32 %v318, %v328
        %v331 = vld [vmem:[%s295] sm:$0xff]
        %333 = vset.pattern.permute.xlu0 0
        %334 = vperm.xlu0 %333, %v331
        %v335 = vpop.permute.xlu0 %334
        %v337 = vmul.f32 %v329, %v335
        %v338 = vmul.f32 %v330, %v335
        %v339 = vld [vmem:[%s288] sm:$0xff]
        %v340 = vld [vmem:[%s288 + $0x8] sm:$0xff]
        %v341 = vadd.f32 %v339, %v337
        %v342 = vadd.f32 %v340, %v338
        %343 = vst [vmem:[%s288] sm:$0xff] %v341
        %344 = vst [vmem:[%s288 + $0x8] sm:$0xff] %v342
        %s345 = sand.u32 %s150, 1
        %s346 = scalar_lea.sflag [#allocation5], %s345
        %s347 = sand.u32 %s150, 1
        %s348 = smul.addr %s347, 16
        %s349 = scalar_lea.vmem [#allocation8], %s348
        // Predicated region
        $region49: #{tpu_custom_call.1} parent=35 // pred_check
          %p350 = pneg %p160
        $region50: #{tpu_custom_call.1} parent=35 // pred_check_branch
          %352 = sbr.rel (%p350) target = $region52
        $region51: #{tpu_custom_call.1} parent=35 // pred_region
          %s354 = ssub.s32 256, 256
          %355 = vsyncadd %s346, %s354
          %s356 = smul.addr %s29, 2
          %s357 = smul.addr %s356, 128
          %s358 = scalar_lea.hbm %s4, %s357
          %s360 = sshll.u32 %s349, 4
          %s361 = int_to_ptr.vmem [resolvable:$true] %s360
          %363 = dma.vmem_to_hbm [thread:$0]  %s361, 256, %s358, %s346
        $region52: #{tpu_custom_call.1} parent=35 // pred_fallthru
          _
      $region36: #{tpu_custom_call.1} parent=5 // pred_fallthru
        _
      %p364 = scmp.le.s32.totalorder 2, %s20
      // Predicated region
      $region53: #{tpu_custom_call.1} parent=5 // pred_check
        %p365 = pneg %p364
      $region54: #{tpu_custom_call.1} parent=5 // pred_check_branch
        %367 = sbr.rel (%p365) target = $region56
      $region55: #{tpu_custom_call.1} parent=5 // pred_region
        %s368 = ssub.s32 %s20, 2
        // Predicated region
        $region57: #{tpu_custom_call.1} parent=55 // pred_check
          %p369 = pneg %p166
        $region58: #{tpu_custom_call.1} parent=55 // pred_check_branch
          %371 = sbr.rel (%p369) target = $region60
        $region59: #{tpu_custom_call.1} parent=55 // pred_region
          %s372 = sand.u32 %s151, 1
          %s373 = scalar_lea.sflag [#allocation5], %s372
          %s374 = sand.u32 %s151, 1
          %s375 = smul.addr %s374, 16
          %s376 = scalar_lea.vmem [#allocation8], %s375
          %377 = dma.done %s373, 256
        $region60: #{tpu_custom_call.1} parent=55 // pred_fallthru
          _
      $region56: #{tpu_custom_call.1} parent=5 // pred_fallthru
        _
    $region6: #{tpu_custom_call.1} parent=1 // loop_footer
      %s24 = sadd.s32 1, %s20
    $region7: #{tpu_custom_call.1} parent=1 // loop_footer_branch
      %19 = sbr.rel target = $region3
    $region8: #{tpu_custom_call.1} parent=1 // loop_exit
      _
    %378 = vsyncpa [#allocation4], 1
    %s379 = scalar_lea.sflag [#allocation4], 1
    %380 = vsyncpa %s379, 1
    %381 = vsyncpa [#allocation7], 1
    %s382 = scalar_lea.sflag [#allocation7], 1
    %383 = vsyncpa %s382, 1
    %384 = vsyncpa [#allocation5], 1
    %s385 = scalar_lea.sflag [#allocation5], 1
    %386 = vsyncpa %s385, 1

</llo_original>
